<compile_context>
chip_gen: v7x
topology: tpu7x:2x2x1
jax: 0.10.0
libtpu: 0.0.40
codegen_flags: <defaults>
</compile_context>

<pallas_src>
import functools

import jax
import jax.numpy as jnp
from jax.experimental import pallas as pl
from jax.experimental.pallas import tpu as pltpu

_LANE = 128  # TPU lane width


# ------------------------------- Pallas kernel --------------------------------

def _gelu2_kernel(x_ref, o_ref, *, compute_dtype):
    # x_ref / o_ref: (block_rows, lanes) lane-dense tiles.
    x = x_ref[...].astype(compute_dtype)
    o_ref[...] = (x * jax.nn.sigmoid(1.702 * x)).astype(o_ref.dtype)


# ------------------------------- small helpers --------------------------------

def _round_up(a, m):
    return (a + m - 1) // m * m


def _gelu2_jnp(x):
    xf = x.astype(jnp.float32)
    return (xf * jax.nn.sigmoid(1.702 * xf)).astype(x.dtype)


@functools.lru_cache(maxsize=None)
def _vmem_limit_bytes():
    # <=75% of physical VMEM, capped at 48 MiB: plenty for 4 x 4 MiB buffers
    # while leaving headroom for compiler scratch (v7x only has 64 MiB total).
    try:
        cap = pltpu.get_tpu_info().vmem_capacity_bytes
        return int(min(48 << 20, 0.75 * cap))
    except Exception:  # conservative fallback, safe on v5e/v6e/v7x
        return 32 << 20


@functools.lru_cache(maxsize=None)
def _compute_dtype_for(dtype):
    # bf16 VPU/EUP are native on v6e/v7x; v5e has neither, so upcast there.
    if dtype == jnp.bfloat16:
        try:
            kind = jax.devices()[0].device_kind.lower()
            is_v5e = ("v5 lite" in kind) or ("v5e" in kind)
        except Exception:
            is_v5e = True
        return jnp.float32 if is_v5e else jnp.bfloat16
    return jnp.float32


# ----------------------------- 2-D slab launcher -------------------------------

def _gelu2_2d(x2d, *, block_bytes):
    """Run the kernel over a 2-D slab whose last dim is the full lane extent."""
    rows, lanes = x2d.shape
    dtype = jnp.dtype(x2d.dtype)
    itemsize = dtype.itemsize
    compute_dtype = _compute_dtype_for(dtype)

    # Sublane granularity of the second-to-last block dim for this dtype.
    sub = 8 if itemsize >= 4 else (16 if itemsize == 2 else 32)

    # Rows per block: ~block_bytes per tile, multiple of `sub`, and no larger
    # than ceil(rows/2) so the grid has >= 2 steps (v7x: 2 TCs) when possible.
    br = max(sub, (block_bytes // (lanes * itemsize)) // sub * sub)
    br = min(br, _round_up(pl.cdiv(rows, 2), sub))
    if br >= rows:
        br = rows                       # single full-extent block (always legal)
    grid = (pl.cdiv(rows, br),)         # last block may be partial -> masked

    n = rows * lanes
    cost = pl.CostEstimate(flops=4 * n, transcendentals=n,
                           bytes_accessed=2 * n * itemsize)

    return pl.pallas_call(
        functools.partial(_gelu2_kernel, compute_dtype=compute_dtype),
        out_shape=jax.ShapeDtypeStruct((rows, lanes), dtype),
        grid_spec=pltpu.PrefetchScalarGridSpec(
            num_scalar_prefetch=0,
            grid=grid,
            in_specs=[pl.BlockSpec((br, lanes), lambda i: (i, 0))],
            out_specs=pl.BlockSpec((br, lanes), lambda i: (i, 0)),
        ),
        compiler_params=pltpu.CompilerParams(
            dimension_semantics=("parallel",),
            vmem_limit_bytes=_vmem_limit_bytes(),
        ),
        cost_estimate=cost,
    )(x2d)


# --------------------------------- wrapper ------------------------------------

@functools.partial(jax.jit, static_argnames=("block_bytes",))
def gelu2(x, *, block_bytes=4 << 20):
    """Elementwise GELU2 (x * sigmoid(1.702 * x)) over an arbitrary array."""
    orig_shape = x.shape
    n = x.size
    if n == 0:
        return x

    flat = x.reshape(-1)  # contiguous reshape: free, no HBM pass

    # Widest lane-dense last dim that divides n exactly -> no pad, no slice.
    lanes = next((c for c in (2048, 1024, 512, 256, 128) if n % c == 0), None)
    if lanes is not None:
        out2d = _gelu2_2d(flat.reshape(n // lanes, lanes), block_bytes=block_bytes)
        return out2d.reshape(orig_shape)

    # Ragged fallback (n not a multiple of 128): kernel over the 128-aligned
    # bulk, plain jnp over the <128-element tail.  Costs one concat over the
    # output instead of full-array pad + slice passes.
    bulk_n = (n // _LANE) * _LANE
    if bulk_n == 0:
        return _gelu2_jnp(x)
    lanes = next((c for c in (2048, 1024, 512, 256) if bulk_n % c == 0), _LANE)
    bulk_out = _gelu2_2d(flat[:bulk_n].reshape(bulk_n // lanes, lanes),
                         block_bytes=block_bytes)
    tail_out = _gelu2_jnp(flat[bulk_n:])
    return jnp.concatenate([bulk_out.reshape(-1), tail_out]).reshape(orig_shape)


# ------------------------------ reference (JAX) --------------------------------

def gelu2_ref(x):
    return x * jax.nn.sigmoid(1.702 * x)


# ----------------------------------- main --------------------------------------

if __name__ == "__main__":
    key = jax.random.PRNGKey(0)

    # (batch, seq, hidden) as used inside the transformer MLP, plus one shape
    # exercising the multi-block / partial-last-block path and one exercising
    # the ragged (non-multiple-of-128) fallback.
    shapes = [(2, 8, 32), (2, 8, 1536), (3, 5, 11)]
    for i, shape in enumerate(shapes):
        k = jax.random.fold_in(key, i)
        x = jax.random.normal(k, shape, dtype=jnp.float32)
        out = jax.block_until_ready(gelu2(x))
        ref = gelu2_ref(x)
        assert out.shape == x.shape
        assert jnp.allclose(out, ref, atol=1e-5, rtol=1e-5), (
            f"shape {shape}: max err {jnp.max(jnp.abs(out - ref))}")

    print("KERNEL_OK")
</pallas_src>

<mosaic_0001>
module attributes {stable_mosaic.version = 11 : i64} {
  func.func @_gelu2_kernel(%arg0: i32, %arg1: memref<1x512xf32, #tpu.memory_space<vmem>>, %arg2: memref<1x512xf32, #tpu.memory_space<vmem>>) attributes {dimension_semantics = [#tpu.dimension_semantics<parallel>], iteration_bounds = array<i64: 1>, scalar_prefetch = 0 : i64, scratch_operands = 0 : i64, tpu.core_type = #tpu.core_type<tc>, window_params = [{transform_indices = @transform_0, window_bounds = array<i64: 1, 512>}, {transform_indices = @transform_1, window_bounds = array<i64: 1, 512>}]} {
    %c0 = arith.constant 0 : index
    %c0_0 = arith.constant 0 : index
    %0 = vector.load %arg1[%c0, %c0_0] : memref<1x512xf32, #tpu.memory_space<vmem>>, vector<1x512xf32>
    %cst = arith.constant 1.702000e+00 : f32
    %1 = vector.broadcast %cst : f32 to vector<1x512xf32>
    %2 = arith.mulf %1, %0 : vector<1x512xf32>
    %3 = arith.negf %2 : vector<1x512xf32>
    %4 = math.exp %3 : vector<1x512xf32>
    %cst_1 = arith.constant 1.000000e+00 : f32
    %5 = vector.broadcast %cst_1 : f32 to vector<1x512xf32>
    %6 = arith.addf %5, %4 : vector<1x512xf32>
    %7 = arith.divf %5, %6 : vector<1x512xf32>
    %8 = arith.mulf %0, %7 : vector<1x512xf32>
    %c0_2 = arith.constant 0 : index
    %c0_3 = arith.constant 0 : index
    %9 = vector.load %arg2[%c0_2, %c0_3] : memref<1x512xf32, #tpu.memory_space<vmem>>, vector<1x512xf32>
    tpu.vector_store %arg2[%c0_2, %c0_3], %8 {strides = array<i32>} : memref<1x512xf32, #tpu.memory_space<vmem>>, vector<1x512xf32>,
    return
  }
  func.func @transform_0(%arg0: i32) -> (i32, i32) {
    %c0_i32 = arith.constant 0 : i32
    %c0_i32_0 = arith.constant 0 : i32
    return %arg0, %c0_i32 : i32, i32
  }
  func.func @transform_1(%arg0: i32) -> (i32, i32) {
    %c0_i32 = arith.constant 0 : i32
    %c0_i32_0 = arith.constant 0 : i32
    return %arg0, %c0_i32 : i32, i32
  }
}

</mosaic_0001>

<llo_original>
// kernel: gelu2.1
$region0: #{gelu2.1}
  #allocation0 [shape = 'u32[]', space=smem, size = 0x4, offset = 0x4, fixed_abs, tag = 'smem constant byte address 0x4 - core index']
  #allocation1 [shape = 'u32[144,128]{1,0:T(1,128)}', space=vmem, size = 0x12000, scoped, tag = 'internal scratch']
  %s0 = inlined_call_operand.vmem [shape: f32[1,512], index: 0, kind: input, shape index: {}]
  %s1 = inlined_call_operand.vmem [shape: f32[1,512], index: 1, kind: output, shape index: {}]
  %s2 = sld [smem:[#allocation0]]
  $region14: #{gelu2.1} parent=0
    _
  %s4 = ssub.s32 1, %s2
  %s5 = scalar_select 0, %s4, %s2
  // Predicated region
  $region2: #{gelu2.1} parent=0 // pred_check
    _
  $region3: #{gelu2.1} parent=0 // pred_check_branch
    %7 = sbr.rel (0) target = $region5
  $region4: #{gelu2.1} parent=0 // pred_region
    _
  $region5: #{gelu2.1} parent=0 // pred_fallthru
    _
  %v8 = vld [vmem:[%s0] sm:$0xf]
  %v9 = vmul.f32 %v8, 1.702
  %v10 = vxor.u32 %v9, 2147483648
  %v11 = vmul.f32 %v10, 1.442695
  %v12 = vpow.pop %v11
  %v13 = vadd.f32 %v12, 1.0
  %v14 = vrcp.pop %v13
  %v15 = vmul.f32 1.0, %v14
  %v16 = vmul.f32 %v8, %v15
  %v17 = vlaneseq
  %vm18 = vcmp.ge.s32.totalorder %v17, 0
  %vm19 = vcmp.lt.s32.totalorder %v17, 512
  %vm20 = vmand %vm18, %vm19
  %21 = vst.msk [vmem:[%s1] sm:$0xf] %vm20, %v16
  // Predicated region
  $region6: #{gelu2.1} parent=0 // pred_check
    _
  $region7: #{gelu2.1} parent=0 // pred_check_branch
    %23 = sbr.rel (0) target = $region9
  $region8: #{gelu2.1} parent=0 // pred_region
    _
  $region9: #{gelu2.1} parent=0 // pred_fallthru
    _
  // Predicated region
  $region10: #{gelu2.1} parent=0 // pred_check
    _
  $region11: #{gelu2.1} parent=0 // pred_check_branch
    %25 = sbr.rel (0) target = $region13
  $region12: #{gelu2.1} parent=0 // pred_region
    _
  $region13: #{gelu2.1} parent=0 // pred_fallthru
    _

</llo_original>
